<compile_context>
chip_gen: v7x
topology: tpu7x:2x2x1
jax: 0.10.0
libtpu: 0.0.40
codegen_flags: <defaults>
</compile_context>

<pallas_src>
import jax
import jax.numpy as jnp
from jax.experimental import pallas as pl
from jax.experimental.pallas import tpu as pltpu

LN_EPS = 1e-5  # nn.LayerNorm default eps


def classifier_kernel(x_ref, cat_ref, w1x_ref, w1c_ref, b1_ref, wm_ref, bm_ref, o_ref):
    # ---- covariate contribution: VPU row-select of w1c (replaces the K=3 one-hot matmul)
    cat = cat_ref[...]                                  # (TB, 1) int32
    n_cat = w1c_ref.shape[0]
    cov = w1c_ref[n_cat - 1:n_cat, :]                   # (1, H) f32, default = last category
    for c in range(n_cat - 2, -1, -1):                  # unrolled at trace time (n_cat=3 -> 2 selects)
        cov = jnp.where(cat == c, w1c_ref[c:c + 1, :], cov)   # -> (TB, H) f32

    # ---- Layer 0 Linear: bf16 MXU inputs, f32 accumulate; covariate + bias added in f32
    h = jnp.dot(x_ref[...], w1x_ref[...], preferred_element_type=jnp.float32)
    h = h + cov + b1_ref[...]                           # (TB, H) f32

    # ---- LayerNorm(elementwise_affine=False), fused statistics (single pass over h)
    inv_n = 1.0 / h.shape[-1]
    s = jnp.sum(h, axis=-1, keepdims=True)
    s2 = jnp.sum(h * h, axis=-1, keepdims=True)
    mean = s * inv_n
    var = jnp.maximum(s2 * inv_n - mean * mean, 0.0)    # biased variance (PyTorch LN)
    h = (h - mean) * jax.lax.rsqrt(var + LN_EPS)

    # ---- ReLU (Dropout p=0.1 is identity in eval mode; intentionally not applied)
    h = jnp.maximum(h, 0.0)

    # ---- mean_layer Linear: bf16 MXU inputs, f32 accumulate + bias
    mu = jnp.dot(h.astype(wm_ref.dtype), wm_ref[...],
                 preferred_element_type=jnp.float32) + bm_ref[...]
    o_ref[...] = mu.astype(o_ref.dtype)


def _vmem_limit_bytes(tb, n_in, n_hidden, n_out, n_cat):
    """Scoped-VMEM budget: double-buffered per-step blocks + resident weights,
    padded to the (sublane, 128-lane) VMEM tiling, plus headroom for intermediates."""
    def padded(rows, cols, itemsize, sublane=8):
        return (-(-rows // sublane) * sublane) * (-(-cols // 128) * 128) * itemsize

    blocks = 2 * (padded(tb, n_in, 2, 16)        # x block (bf16), double-buffered
                  + padded(tb, 1, 4)             # cat block (int32)
                  + padded(tb, n_out, 4))        # out block (f32)
    weights = 2 * (padded(n_in, n_hidden, 2, 16) + padded(n_cat, n_hidden, 4)
                   + padded(1, n_hidden, 4) + padded(n_hidden, n_out, 2, 16)
                   + padded(1, n_out, 4))
    return max(blocks + weights + (8 << 20), 16 << 20)


def classifier_forward(x, cat_idx, w1x, w1c, b1, wm, bm, *, tb=1024):
    """x: (B, n_in) f32, cat_idx: (B, 1) int32.  Weights pre-transposed as (in, out)."""
    B, n_in = x.shape
    n_hidden = w1x.shape[1]
    n_out = wm.shape[1]
    n_cat = w1c.shape[0]

    tb = max(8, min(tb, B))
    tb = (tb // 8) * 8                    # sublane-aligned batch tile
    grid = (pl.cdiv(B, tb),)

    # Stream activations / matmul weights from HBM in bf16 (MXU-native, half the bytes).
    x_bf16 = x.astype(jnp.bfloat16)
    w1x_bf16 = w1x.astype(jnp.bfloat16)
    wm_bf16 = wm.astype(jnp.bfloat16)

    def batch_spec(cols):
        return pl.BlockSpec((tb, cols), lambda i: (i, 0))

    def const_spec(shape):
        return pl.BlockSpec(shape, lambda i: (0, 0))   # VMEM-resident across grid steps

    return pl.pallas_call(
        classifier_kernel,
        out_shape=jax.ShapeDtypeStruct((B, n_out), jnp.float32),
        grid=grid,
        in_specs=[
            batch_spec(n_in),                 # x (bf16)
            batch_spec(1),                    # cat indices (int32)
            const_spec((n_in, n_hidden)),     # W1x (bf16)
            const_spec((n_cat, n_hidden)),    # W1c (f32)
            const_spec((1, n_hidden)),        # b1 (f32)
            const_spec((n_hidden, n_out)),    # Wm (bf16)
            const_spec((1, n_out)),           # bm (f32)
        ],
        out_specs=batch_spec(n_out),
        compiler_params=pltpu.CompilerParams(
            dimension_semantics=("parallel",),
            vmem_limit_bytes=_vmem_limit_bytes(tb, n_in, n_hidden, n_out, n_cat),
        ),
    )(x_bf16, cat_idx, w1x_bf16, w1c, b1, wm_bf16, bm)


# ----------------------------- pure-JAX reference ---------------------------------------
def _layer_norm_ref(h):
    mean = jnp.mean(h, axis=-1, keepdims=True)
    var = jnp.mean(jnp.square(h - mean), axis=-1, keepdims=True)
    return (h - mean) * jax.lax.rsqrt(var + LN_EPS)


def classifier_reference(x, cat_idx, w1x, w1c, b1, wm, bm, matmul_dtype=jnp.float32):
    """Mirror of classifier_layer.forward (eval mode).

    matmul_dtype=float32 -> exactly the PyTorch forward (split x@W1x + one_hot@W1c equals
    concat([x, one_hot]) @ W1).  matmul_dtype=bfloat16 -> mirrors the kernel's MXU inputs.
    """
    onehot = jax.nn.one_hot(cat_idx[:, 0], w1c.shape[0], dtype=jnp.float32)
    h = jnp.dot(x.astype(matmul_dtype), w1x.astype(matmul_dtype),
                preferred_element_type=jnp.float32)
    h = h + onehot @ w1c + b1
    h = _layer_norm_ref(h)
    h = jnp.maximum(h, 0.0)
    mu = jnp.dot(h.astype(matmul_dtype), wm.astype(matmul_dtype),
                 preferred_element_type=jnp.float32) + bm
    return mu


if __name__ == "__main__":
    B, N_IN, N_HIDDEN, N_OUT, N_CAT = 512, 32, 64, 16, 3
    TB = 128   # 4 grid steps -> exercises the pipelined, double-buffered batch grid

    key = jax.random.PRNGKey(0)
    kx, kc, k1, k2, k3, k4 = jax.random.split(key, 6)

    x = jax.random.normal(kx, (B, N_IN), dtype=jnp.float32)
    cat_idx = jax.random.randint(kc, (B, 1), 0, N_CAT, dtype=jnp.int32)

    # PyTorch-Linear-style uniform init; weights stored pre-transposed as (in, out).
    fan1 = N_IN + N_CAT
    bound1 = 1.0 / fan1 ** 0.5
    w1 = jax.random.uniform(k1, (fan1, N_HIDDEN), jnp.float32, -bound1, bound1)
    w1x, w1c = w1[:N_IN], w1[N_IN:]
    b1 = jax.random.uniform(k2, (1, N_HIDDEN), jnp.float32, -bound1, bound1)
    bound2 = 1.0 / N_HIDDEN ** 0.5
    wm = jax.random.uniform(k3, (N_HIDDEN, N_OUT), jnp.float32, -bound2, bound2)
    bm = jax.random.uniform(k4, (1, N_OUT), jnp.float32, -bound2, bound2)

    out = classifier_forward(x, cat_idx, w1x, w1c, b1, wm, bm, tb=TB)
    out = jax.block_until_ready(out)
    assert out.shape == (B, N_OUT)

    # Tight check against a reference mirroring the kernel's bf16 MXU inputs.
    ref_bf16 = classifier_reference(x, cat_idx, w1x, w1c, b1, wm, bm,
                                    matmul_dtype=jnp.bfloat16)
    assert jnp.allclose(out, ref_bf16, atol=1e-3, rtol=1e-3), \
        f"bf16-matched max err {float(jnp.max(jnp.abs(out - ref_bf16)))}"

    # Module-fidelity check against the pure-f32 PyTorch forward (tolerance reflects the
    # bf16 quantization of the matmul inputs).
    ref_f32 = classifier_reference(x, cat_idx, w1x, w1c, b1, wm, bm,
                                   matmul_dtype=jnp.float32)
    assert jnp.allclose(out, ref_f32, atol=5e-2, rtol=5e-2), \
        f"f32-reference max err {float(jnp.max(jnp.abs(out - ref_f32)))}"

    print("KERNEL_OK")
</pallas_src>

<mosaic_0001>
module attributes {stable_mosaic.version = 11 : i64} {
  func.func @classifier_kernel(%arg0: i32, %arg1: memref<128x32xbf16, #tpu.memory_space<vmem>>, %arg2: memref<128x1xi32, #tpu.memory_space<vmem>>, %arg3: memref<32x64xbf16, #tpu.memory_space<vmem>>, %arg4: memref<3x64xf32, #tpu.memory_space<vmem>>, %arg5: memref<1x64xf32, #tpu.memory_space<vmem>>, %arg6: memref<64x16xbf16, #tpu.memory_space<vmem>>, %arg7: memref<1x16xf32, #tpu.memory_space<vmem>>, %arg8: memref<128x16xf32, #tpu.memory_space<vmem>>) attributes {dimension_semantics = [#tpu.dimension_semantics<parallel>], iteration_bounds = array<i64: 4>, scalar_prefetch = 0 : i64, scratch_operands = 0 : i64, tpu.core_type = #tpu.core_type<tc>, window_params = [{transform_indices = @transform_0, window_bounds = array<i64: 128, 32>}, {transform_indices = @transform_1, window_bounds = array<i64: 128, 1>}, {pipeline_mode = #tpu.pipeline_mode<synchronous>, transform_indices = @transform_2, window_bounds = array<i64: 32, 64>}, {pipeline_mode = #tpu.pipeline_mode<synchronous>, transform_indices = @transform_3, window_bounds = array<i64: 3, 64>}, {pipeline_mode = #tpu.pipeline_mode<synchronous>, transform_indices = @transform_4, window_bounds = array<i64: 1, 64>}, {pipeline_mode = #tpu.pipeline_mode<synchronous>, transform_indices = @transform_5, window_bounds = array<i64: 64, 16>}, {pipeline_mode = #tpu.pipeline_mode<synchronous>, transform_indices = @transform_6, window_bounds = array<i64: 1, 16>}, {transform_indices = @transform_7, window_bounds = array<i64: 128, 16>}]} {
    %c0 = arith.constant 0 : index
    %c0_0 = arith.constant 0 : index
    %0 = vector.load %arg2[%c0, %c0_0] : memref<128x1xi32, #tpu.memory_space<vmem>>, vector<128x1xi32>
    %c2 = arith.constant 2 : index
    %c0_1 = arith.constant 0 : index
    %1 = vector.load %arg4[%c2, %c0_1] : memref<3x64xf32, #tpu.memory_space<vmem>>, vector<1x64xf32>
    %c1_i32 = arith.constant 1 : i32
    %2 = vector.broadcast %c1_i32 : i32 to vector<128x1xi32>
    %3 = arith.cmpi eq, %0, %2 : vector<128x1xi32>
    %c1 = arith.constant 1 : index
    %c0_2 = arith.constant 0 : index
    %4 = vector.load %arg4[%c1, %c0_2] : memref<3x64xf32, #tpu.memory_space<vmem>>, vector<1x64xf32>
    %5 = vector.shape_cast %3 : vector<128x1xi1> to vector<128x1xi1>
    %6 = vector.broadcast %5 : vector<128x1xi1> to vector<128x64xi1>
    %7 = vector.shape_cast %4 : vector<1x64xf32> to vector<1x64xf32>
    %8 = vector.broadcast %7 : vector<1x64xf32> to vector<128x64xf32>
    %9 = vector.shape_cast %1 : vector<1x64xf32> to vector<1x64xf32>
    %10 = vector.broadcast %9 : vector<1x64xf32> to vector<128x64xf32>
    %11 = arith.select %6, %8, %10 : vector<128x64xi1>, vector<128x64xf32>
    %c0_i32 = arith.constant 0 : i32
    %12 = vector.broadcast %c0_i32 : i32 to vector<128x1xi32>
    %13 = arith.cmpi eq, %0, %12 : vector<128x1xi32>
    %c0_3 = arith.constant 0 : index
    %c0_4 = arith.constant 0 : index
    %14 = vector.load %arg4[%c0_3, %c0_4] : memref<3x64xf32, #tpu.memory_space<vmem>>, vector<1x64xf32>
    %15 = vector.shape_cast %13 : vector<128x1xi1> to vector<128x1xi1>
    %16 = vector.broadcast %15 : vector<128x1xi1> to vector<128x64xi1>
    %17 = vector.shape_cast %14 : vector<1x64xf32> to vector<1x64xf32>
    %18 = vector.broadcast %17 : vector<1x64xf32> to vector<128x64xf32>
    %19 = arith.select %16, %18, %11 : vector<128x64xi1>, vector<128x64xf32>
    %c0_5 = arith.constant 0 : index
    %c0_6 = arith.constant 0 : index
    %20 = vector.load %arg1[%c0_5, %c0_6] : memref<128x32xbf16, #tpu.memory_space<vmem>>, vector<128x32xbf16>
    %c0_7 = arith.constant 0 : index
    %c0_8 = arith.constant 0 : index
    %21 = vector.load %arg3[%c0_7, %c0_8] : memref<32x64xbf16, #tpu.memory_space<vmem>>, vector<32x64xbf16>
    %cst = arith.constant dense<0.000000e+00> : vector<128x64xf32>
    %22 = tpu.matmul %20, %21, %cst {dimension_numbers = #tpu.dot_dimension_numbers<[1], [0], [0], [1], [0, 0, 1, 1], [], []>} : vector<128x32xbf16>, vector<32x64xbf16>, vector<128x64xf32> -> vector<128x64xf32>
    %23 = arith.addf %22, %19 : vector<128x64xf32>
    %c0_9 = arith.constant 0 : index
    %c0_10 = arith.constant 0 : index
    %24 = vector.load %arg5[%c0_9, %c0_10] : memref<1x64xf32, #tpu.memory_space<vmem>>, vector<1x64xf32>
    %25 = vector.broadcast %24 : vector<1x64xf32> to vector<128x64xf32>
    %26 = arith.addf %23, %25 : vector<128x64xf32>
    %cst_11 = arith.constant dense<0.000000e+00> : vector<128xf32>
    %27 = vector.multi_reduction <add>, %26, %cst_11 [1] : vector<128x64xf32> to vector<128xf32>
    %28 = vector.shape_cast %27 : vector<128xf32> to vector<128x1xf32>
    %29 = arith.mulf %26, %26 : vector<128x64xf32>
    %cst_12 = arith.constant dense<0.000000e+00> : vector<128xf32>
    %30 = vector.multi_reduction <add>, %29, %cst_12 [1] : vector<128x64xf32> to vector<128xf32>
    %31 = vector.shape_cast %30 : vector<128xf32> to vector<128x1xf32>
    %cst_13 = arith.constant 1.562500e-02 : f32
    %32 = vector.broadcast %cst_13 : f32 to vector<128x1xf32>
    %33 = arith.mulf %28, %32 : vector<128x1xf32>
    %cst_14 = arith.constant 1.562500e-02 : f32
    %34 = vector.broadcast %cst_14 : f32 to vector<128x1xf32>
    %35 = arith.mulf %31, %34 : vector<128x1xf32>
    %36 = arith.mulf %33, %33 : vector<128x1xf32>
    %37 = arith.subf %35, %36 : vector<128x1xf32>
    %cst_15 = arith.constant 0.000000e+00 : f32
    %38 = vector.broadcast %cst_15 : f32 to vector<128x1xf32>
    %39 = arith.maximumf %37, %38 : vector<128x1xf32>
    %40 = vector.broadcast %33 : vector<128x1xf32> to vector<128x64xf32>
    %41 = arith.subf %26, %40 : vector<128x64xf32>
    %cst_16 = arith.constant 9.99999974E-6 : f32
    %42 = vector.broadcast %cst_16 : f32 to vector<128x1xf32>
    %43 = arith.addf %39, %42 : vector<128x1xf32>
    %44 = math.rsqrt %43 : vector<128x1xf32>
    %45 = vector.broadcast %44 : vector<128x1xf32> to vector<128x64xf32>
    %46 = arith.mulf %41, %45 : vector<128x64xf32>
    %cst_17 = arith.constant 0.000000e+00 : f32
    %47 = vector.broadcast %cst_17 : f32 to vector<128x64xf32>
    %48 = arith.maximumf %46, %47 : vector<128x64xf32>
    %49 = arith.truncf %48 : vector<128x64xf32> to vector<128x64xbf16>
    %c0_18 = arith.constant 0 : index
    %c0_19 = arith.constant 0 : index
    %50 = vector.load %arg6[%c0_18, %c0_19] : memref<64x16xbf16, #tpu.memory_space<vmem>>, vector<64x16xbf16>
    %cst_20 = arith.constant dense<0.000000e+00> : vector<128x16xf32>
    %51 = tpu.matmul %49, %50, %cst_20 {dimension_numbers = #tpu.dot_dimension_numbers<[1], [0], [0], [1], [0, 0, 1, 1], [], []>} : vector<128x64xbf16>, vector<64x16xbf16>, vector<128x16xf32> -> vector<128x16xf32>
    %c0_21 = arith.constant 0 : index
    %c0_22 = arith.constant 0 : index
    %52 = vector.load %arg7[%c0_21, %c0_22] : memref<1x16xf32, #tpu.memory_space<vmem>>, vector<1x16xf32>
    %53 = vector.broadcast %52 : vector<1x16xf32> to vector<128x16xf32>
    %54 = arith.addf %51, %53 : vector<128x16xf32>
    %c0_23 = arith.constant 0 : index
    %c0_24 = arith.constant 0 : index
    %55 = vector.load %arg8[%c0_23, %c0_24] : memref<128x16xf32, #tpu.memory_space<vmem>>, vector<128x16xf32>
    tpu.vector_store %arg8[%c0_23, %c0_24], %54 {strides = array<i32>} : memref<128x16xf32, #tpu.memory_space<vmem>>, vector<128x16xf32>,
    return
  }
  func.func @transform_0(%arg0: i32) -> (i32, i32) {
    %c0_i32 = arith.constant 0 : i32
    %c0_i32_0 = arith.constant 0 : i32
    return %arg0, %c0_i32 : i32, i32
  }
  func.func @transform_1(%arg0: i32) -> (i32, i32) {
    %c0_i32 = arith.constant 0 : i32
    %c0_i32_0 = arith.constant 0 : i32
    return %arg0, %c0_i32 : i32, i32
  }
  func.func @transform_2(%arg0: i32) -> (i32, i32) {
    %c0_i32 = arith.constant 0 : i32
    %c0_i32_0 = arith.constant 0 : i32
    %c0_i32_1 = arith.constant 0 : i32
    return %c0_i32, %c0_i32_0 : i32, i32
  }
  func.func @transform_3(%arg0: i32) -> (i32, i32) {
    %c0_i32 = arith.constant 0 : i32
    %c0_i32_0 = arith.constant 0 : i32
    %c0_i32_1 = arith.constant 0 : i32
    return %c0_i32, %c0_i32_0 : i32, i32
  }
  func.func @transform_4(%arg0: i32) -> (i32, i32) {
    %c0_i32 = arith.constant 0 : i32
    %c0_i32_0 = arith.constant 0 : i32
    %c0_i32_1 = arith.constant 0 : i32
    return %c0_i32, %c0_i32_0 : i32, i32
  }
  func.func @transform_5(%arg0: i32) -> (i32, i32) {
    %c0_i32 = arith.constant 0 : i32
    %c0_i32_0 = arith.constant 0 : i32
    %c0_i32_1 = arith.constant 0 : i32
    return %c0_i32, %c0_i32_0 : i32, i32
  }
  func.func @transform_6(%arg0: i32) -> (i32, i32) {
    %c0_i32 = arith.constant 0 : i32
    %c0_i32_0 = arith.constant 0 : i32
    %c0_i32_1 = arith.constant 0 : i32
    return %c0_i32, %c0_i32_0 : i32, i32
  }
  func.func @transform_7(%arg0: i32) -> (i32, i32) {
    %c0_i32 = arith.constant 0 : i32
    %c0_i32_0 = arith.constant 0 : i32
    return %arg0, %c0_i32 : i32, i32
  }
}

</mosaic_0001>

<llo_original>
// kernel: tpu_custom_call.1
$region0: #{tpu_custom_call.1}
  #allocation0 [shape = 'u32[]', space=smem, size = 0x4, offset = 0x4, fixed_abs, tag = 'smem constant byte address 0x4 - core index']
  #allocation1 [shape = 'u32[144,128]{1,0:T(1,128)}', space=vmem, size = 0x12000, scoped, tag = 'internal scratch']
  %s0 = inlined_call_operand.vmem [shape: bf16[512,32], index: 0, kind: input, shape index: {}]
  %s1 = inlined_call_operand.vmem [shape: s32[512,1], index: 1, kind: input, shape index: {}]
  %s2 = inlined_call_operand.vmem [shape: bf16[32,64], index: 2, kind: input, shape index: {}]
  %s3 = inlined_call_operand.vmem [shape: f32[3,64], index: 3, kind: input, shape index: {}]
  %s4 = inlined_call_operand.vmem [shape: f32[1,64], index: 4, kind: input, shape index: {}]
  %s5 = inlined_call_operand.vmem [shape: bf16[64,16], index: 5, kind: input, shape index: {}]
  %s6 = inlined_call_operand.vmem [shape: f32[1,16], index: 6, kind: input, shape index: {}]
  %s7 = inlined_call_operand.vmem [shape: f32[512,16], index: 7, kind: output, shape index: {}]
  %s8 = sld [smem:[#allocation0]]
  $region61: #{tpu_custom_call.1} parent=0
    _
  %s10 = ssub.s32 1, %s8
  %s11 = scalar_select 0, %s10, %s8
  loop: start=0, step=1, limit=6
  $region2: #{tpu_custom_call.1} parent=0 // loop_pre_header
    _
  $region3: #{tpu_custom_call.1} parent=0 // loop_header
    %s13 = sphi 0, %s17
    %p14 = scmp.ge.s32.totalorder %s13, 6
    %s23 = sphi 0, %s25
    %s26 = sphi 0, %s23
    %s27 = sphi 0, %s26
    %s43 = sphi 0, %s27
    %s49 = sphi 0, %s51
    %s52 = sphi 0, %s49
    %s53 = sphi 0, %s52
    %s69 = sphi 0, %s53
    %s73 = sphi 0, %s73
    %s75 = sphi 0, %s73
    %s76 = sphi 0, %s75
    %s90 = sphi 0, %s76
    %s94 = sphi 0, %s94
    %s96 = sphi 0, %s94
    %s97 = sphi 0, %s96
    %s111 = sphi 0, %s97
    %s115 = sphi 0, %s115
    %s117 = sphi 0, %s115
    %s118 = sphi 0, %s117
    %s132 = sphi 0, %s118
    %s136 = sphi 0, %s136
    %s138 = sphi 0, %s136
    %s139 = sphi 0, %s138
    %s153 = sphi 0, %s139
    %s157 = sphi 0, %s157
    %s159 = sphi 0, %s157
    %s160 = sphi 0, %s159
    %s174 = sphi 0, %s160
    %s180 = sphi 0, %s182
    %s183 = sphi 0, %s180
    %s184 = sphi 0, %s183
    %s200 = sphi 0, %s184
  $region4: #{tpu_custom_call.1} parent=0 // loop_header_branch
    %16 = sbr.rel (%p14) target = $region8
  $region5: #{tpu_custom_call.1} parent=0 // loop_body
    %s18 = ssub.s32 %s13, 1
    %s19 = ssub.s32 %s13, 2
    %s20 = sadd.s32 %s13, 1
    %s21 = ssub.s32 %s13, %s20
    %p22 = scmp.eq.s32.totalorder %s21, 0
    %s24 = sadd.s32 %s23, 1
    %s25 = scalar_select %p22, %s23, %s24
    %p28 = pneg %p22
    %p29 = scmp.eq.s32.totalorder %s13, 3
    %p30 = por %p28, %p29
    %p31 = scmp.ne.s32.totalorder %s23, %s26
    %p32 = scmp.eq.s32.totalorder %s13, 0
    %p33 = por %p31, %p32
    %p34 = scmp.ne.s32.totalorder %s23, %s26
    %p35 = scmp.eq.s32.totalorder %s18, 3
    %p36 = por %p34, %p35
    %p37 = scmp.ne.s32.totalorder %s26, %s27
    %p38 = scmp.eq.s32.totalorder %s18, 0
    %p39 = por %p37, %p38
    %p40 = scmp.ne.s32.totalorder %s26, %s27
    %p41 = scmp.eq.s32.totalorder %s19, 3
    %p42 = por %p40, %p41
    %p44 = scmp.ne.s32.totalorder %s27, %s43
    %p45 = scmp.eq.s32.totalorder %s19, 0
    %p46 = por %p44, %p45
    %s47 = ssub.s32 %s13, %s20
    %p48 = scmp.eq.s32.totalorder %s47, 0
    %s50 = sadd.s32 %s49, 1
    %s51 = scalar_select %p48, %s49, %s50
    %p54 = pneg %p48
    %p55 = scmp.eq.s32.totalorder %s13, 3
    %p56 = por %p54, %p55
    %p57 = scmp.ne.s32.totalorder %s49, %s52
    %p58 = scmp.eq.s32.totalorder %s13, 0
    %p59 = por %p57, %p58
    %p60 = scmp.ne.s32.totalorder %s49, %s52
    %p61 = scmp.eq.s32.totalorder %s18, 3
    %p62 = por %p60, %p61
    %p63 = scmp.ne.s32.totalorder %s52, %s53
    %p64 = scmp.eq.s32.totalorder %s18, 0
    %p65 = por %p63, %p64
    %p66 = scmp.ne.s32.totalorder %s52, %s53
    %p67 = scmp.eq.s32.totalorder %s19, 3
    %p68 = por %p66, %p67
    %p70 = scmp.ne.s32.totalorder %s53, %s69
    %p71 = scmp.eq.s32.totalorder %s19, 0
    %p72 = por %p70, %p71
    %s74 = sadd.s32 %s73, 1
    %p77 = scmp.eq.s32.totalorder %s13, 3
    %p78 = scmp.ne.s32.totalorder %s73, %s75
    %p79 = scmp.eq.s32.totalorder %s13, 0
    %p80 = por %p78, %p79
    %p81 = scmp.ne.s32.totalorder %s73, %s75
    %p82 = scmp.eq.s32.totalorder %s18, 3
    %p83 = por %p81, %p82
    %p84 = scmp.ne.s32.totalorder %s75, %s76
    %p85 = scmp.eq.s32.totalorder %s18, 0
    %p86 = por %p84, %p85
    %p87 = scmp.ne.s32.totalorder %s75, %s76
    %p88 = scmp.eq.s32.totalorder %s19, 3
    %p89 = por %p87, %p88
    %p91 = scmp.ne.s32.totalorder %s76, %s90
    %p92 = scmp.eq.s32.totalorder %s19, 0
    %p93 = por %p91, %p92
    %s95 = sadd.s32 %s94, 1
    %p98 = scmp.eq.s32.totalorder %s13, 3
    %p99 = scmp.ne.s32.totalorder %s94, %s96
    %p100 = scmp.eq.s32.totalorder %s13, 0
    %p101 = por %p99, %p100
    %p102 = scmp.ne.s32.totalorder %s94, %s96
    %p103 = scmp.eq.s32.totalorder %s18, 3
    %p104 = por %p102, %p103
    %p105 = scmp.ne.s32.totalorder %s96, %s97
    %p106 = scmp.eq.s32.totalorder %s18, 0
    %p107 = por %p105, %p106
    %p108 = scmp.ne.s32.totalorder %s96, %s97
    %p109 = scmp.eq.s32.totalorder %s19, 3
    %p110 = por %p108, %p109
    %p112 = scmp.ne.s32.totalorder %s97, %s111
    %p113 = scmp.eq.s32.totalorder %s19, 0
    %p114 = por %p112, %p113
    %s116 = sadd.s32 %s115, 1
    %p119 = scmp.eq.s32.totalorder %s13, 3
    %p120 = scmp.ne.s32.totalorder %s115, %s117
    %p121 = scmp.eq.s32.totalorder %s13, 0
    %p122 = por %p120, %p121
    %p123 = scmp.ne.s32.totalorder %s115, %s117
    %p124 = scmp.eq.s32.totalorder %s18, 3
    %p125 = por %p123, %p124
    %p126 = scmp.ne.s32.totalorder %s117, %s118
    %p127 = scmp.eq.s32.totalorder %s18, 0
    %p128 = por %p126, %p127
    %p129 = scmp.ne.s32.totalorder %s117, %s118
    %p130 = scmp.eq.s32.totalorder %s19, 3
    %p131 = por %p129, %p130
    %p133 = scmp.ne.s32.totalorder %s118, %s132
    %p134 = scmp.eq.s32.totalorder %s19, 0
    %p135 = por %p133, %p134
    %s137 = sadd.s32 %s136, 1
    %p140 = scmp.eq.s32.totalorder %s13, 3
    %p141 = scmp.ne.s32.totalorder %s136, %s138
    %p142 = scmp.eq.s32.totalorder %s13, 0
    %p143 = por %p141, %p142
    %p144 = scmp.ne.s32.totalorder %s136, %s138
    %p145 = scmp.eq.s32.totalorder %s18, 3
    %p146 = por %p144, %p145
    %p147 = scmp.ne.s32.totalorder %s138, %s139
    %p148 = scmp.eq.s32.totalorder %s18, 0
    %p149 = por %p147, %p148
    %p150 = scmp.ne.s32.totalorder %s138, %s139
    %p151 = scmp.eq.s32.totalorder %s19, 3
    %p152 = por %p150, %p151
    %p154 = scmp.ne.s32.totalorder %s139, %s153
    %p155 = scmp.eq.s32.totalorder %s19, 0
    %p156 = por %p154, %p155
    %s158 = sadd.s32 %s157, 1
    %p161 = scmp.eq.s32.totalorder %s13, 3
    %p162 = scmp.ne.s32.totalorder %s157, %s159
    %p163 = scmp.eq.s32.totalorder %s13, 0
    %p164 = por %p162, %p163
    %p165 = scmp.ne.s32.totalorder %s157, %s159
    %p166 = scmp.eq.s32.totalorder %s18, 3
    %p167 = por %p165, %p166
    %p168 = scmp.ne.s32.totalorder %s159, %s160
    %p169 = scmp.eq.s32.totalorder %s18, 0
    %p170 = por %p168, %p169
    %p171 = scmp.ne.s32.totalorder %s159, %s160
    %p172 = scmp.eq.s32.totalorder %s19, 3
    %p173 = por %p171, %p172
    %p175 = scmp.ne.s32.totalorder %s160, %s174
    %p176 = scmp.eq.s32.totalorder %s19, 0
    %p177 = por %p175, %p176
    %s178 = ssub.s32 %s13, %s20
    %p179 = scmp.eq.s32.totalorder %s178, 0
    %s181 = sadd.s32 %s180, 1
    %s182 = scalar_select %p179, %s180, %s181
    %p185 = pneg %p179
    %p186 = scmp.eq.s32.totalorder %s13, 3
    %p187 = por %p185, %p186
    %p188 = scmp.ne.s32.totalorder %s180, %s183
    %p189 = scmp.eq.s32.totalorder %s13, 0
    %p190 = por %p188, %p189
    %p191 = scmp.ne.s32.totalorder %s180, %s183
    %p192 = scmp.eq.s32.totalorder %s18, 3
    %p193 = por %p191, %p192
    %p194 = scmp.ne.s32.totalorder %s183, %s184
    %p195 = scmp.eq.s32.totalorder %s18, 0
    %p196 = por %p194, %p195
    %p197 = scmp.ne.s32.totalorder %s183, %s184
    %p198 = scmp.eq.s32.totalorder %s19, 3
    %p199 = por %p197, %p198
    %p201 = scmp.ne.s32.totalorder %s184, %s200
    %p202 = scmp.eq.s32.totalorder %s19, 0
    %p203 = por %p201, %p202
    %p204 = scmp.le.s32.totalorder 1, %s13
    %p205 = scmp.lt.s32.totalorder %s13, 5
    %p206 = pnand %p204, %p205
    %p207 = pneg %p206
    // Predicated region
    $region9: #{tpu_custom_call.1} parent=5 // pred_check
      _
    $region10: #{tpu_custom_call.1} parent=5 // pred_check_branch
      %209 = sbr.rel (%p206) target = $region12
    $region11: #{tpu_custom_call.1} parent=5 // pred_region
      %s210 = ssub.s32 %s13, 1
      // Predicated region
      $region13: #{tpu_custom_call.1} parent=11 // pred_check
        %p211 = pneg %p86
      $region14: #{tpu_custom_call.1} parent=11 // pred_check_branch
        %213 = sbr.rel (%p211) target = $region16
      $region15: #{tpu_custom_call.1} parent=11 // pred_region
        _
      $region16: #{tpu_custom_call.1} parent=11 // pred_fallthru
        _
      // Predicated region
      $region17: #{tpu_custom_call.1} parent=11 // pred_check
        %p214 = pneg %p107
      $region18: #{tpu_custom_call.1} parent=11 // pred_check_branch
        %216 = sbr.rel (%p214) target = $region20
      $region19: #{tpu_custom_call.1} parent=11 // pred_region
        _
      $region20: #{tpu_custom_call.1} parent=11 // pred_fallthru
        _
      // Predicated region
      $region21: #{tpu_custom_call.1} parent=11 // pred_check
        %p217 = pneg %p128
      $region22: #{tpu_custom_call.1} parent=11 // pred_check_branch
        %219 = sbr.rel (%p217) target = $region24
      $region23: #{tpu_custom_call.1} parent=11 // pred_region
        _
      $region24: #{tpu_custom_call.1} parent=11 // pred_fallthru
        _
      // Predicated region
      $region25: #{tpu_custom_call.1} parent=11 // pred_check
        %p220 = pneg %p149
      $region26: #{tpu_custom_call.1} parent=11 // pred_check_branch
        %222 = sbr.rel (%p220) target = $region28
      $region27: #{tpu_custom_call.1} parent=11 // pred_region
        _
      $region28: #{tpu_custom_call.1} parent=11 // pred_fallthru
        _
      // Predicated region
      $region29: #{tpu_custom_call.1} parent=11 // pred_check
        %p223 = pneg %p170
      $region30: #{tpu_custom_call.1} parent=11 // pred_check_branch
        %225 = sbr.rel (%p223) target = $region32
      $region31: #{tpu_custom_call.1} parent=11 // pred_region
        _
      $region32: #{tpu_custom_call.1} parent=11 // pred_fallthru
        _
    $region12: #{tpu_custom_call.1} parent=5 // pred_fallthru
      _
    %p226 = scmp.lt.s32.totalorder %s13, 4
    // Predicated region
    $region33: #{tpu_custom_call.1} parent=5 // pred_check
      %p227 = pneg %p226
    $region34: #{tpu_custom_call.1} parent=5 // pred_check_branch
      %229 = sbr.rel (%p227) target = $region36
    $region35: #{tpu_custom_call.1} parent=5 // pred_region
      // Predicated region
      $region37: #{tpu_custom_call.1} parent=35 // pred_check
        %p230 = pneg %p33
      $region38: #{tpu_custom_call.1} parent=35 // pred_check_branch
        %232 = sbr.rel (%p230) target = $region40
      $region39: #{tpu_custom_call.1} parent=35 // pred_region
        %s233 = smul.u32 16, %s13
        %p234 = scmp.lt.s32.totalorder %s233, 63
        %s235 = scalar_select %p234, %s233, 63
        %s236 = smul.addr %s235, 4
        %s237 = scalar_lea.vmem %s0, %s236
        %s238 = smul.u32 16, %s13
      $region40: #{tpu_custom_call.1} parent=35 // pred_fallthru
        _
      // Predicated region
      $region41: #{tpu_custom_call.1} parent=35 // pred_check
        %p239 = pneg %p59
      $region42: #{tpu_custom_call.1} parent=35 // pred_check_branch
        %241 = sbr.rel (%p239) target = $region44
      $region43: #{tpu_custom_call.1} parent=35 // pred_region
        %s242 = smul.u32 16, %s13
        %p243 = scmp.lt.s32.totalorder %s242, 63
        %s244 = scalar_select %p243, %s242, 63
        %s245 = smul.addr %s244, 8
        %s246 = scalar_lea.vmem %s1, %s245
        %s247 = smul.u32 16, %s13
      $region44: #{tpu_custom_call.1} parent=35 // pred_fallthru
        _
    $region36: #{tpu_custom_call.1} parent=5 // pred_fallthru
      _
    %p248 = scmp.le.s32.totalorder 1, %s13
    %p249 = scmp.lt.s32.totalorder %s13, 5
    %p250 = pnand %p248, %p249
    %p251 = pneg %p250
    // Predicated region
    $region45: #{tpu_custom_call.1} parent=5 // pred_check
      _
    $region46: #{tpu_custom_call.1} parent=5 // pred_check_branch
      %253 = sbr.rel (%p250) target = $region48
    $region47: #{tpu_custom_call.1} parent=5 // pred_region
      %s254 = ssub.s32 %s13, 1
      %s255 = smul.u32 16, %s18
      %p256 = scmp.lt.s32.totalorder %s255, 63
      %s257 = scalar_select %p256, %s255, 63
      %s258 = smul.addr %s257, 4
      %s259 = scalar_lea.vmem %s0, %s258
      %p260 = pneg %p39
      %p261 = pneg %p36
      %s262 = smul.u32 16, %s18
      %p263 = scmp.lt.s32.totalorder %s262, 63
      %s264 = scalar_select %p263, %s262, 63
      %s265 = smul.addr %s264, 8
      %s266 = scalar_lea.vmem %s1, %s265
      %p267 = pneg %p65
      %p268 = pneg %p62
      %p269 = pneg %p86
      %p270 = pneg %p83
      %p271 = pneg %p107
      %p272 = pneg %p104
      %p273 = pneg %p128
      %p274 = pneg %p125
      %p275 = pneg %p149
      %p276 = pneg %p146
      %p277 = pneg %p170
      %p278 = pneg %p167
      %p279 = pneg %p196
      %p280 = pneg %p193
      %s281 = smul.u32 16, %s18
      %p282 = scmp.lt.s32.totalorder %s281, 63
      %s283 = scalar_select %p282, %s281, 63
      %s284 = smul.addr %s283, 8
      %s285 = scalar_lea.vmem %s7, %s284
      %s286 = smul.u32 16, %s18
      %p287 = scmp.lt.s32.totalorder %s286, 63
      %s288 = scalar_select %p287, %s286, 63
      %s289 = smul.addr %s288, 4
      %s290 = scalar_lea.vmem %s0, %s289
      %s291 = smul.u32 16, %s18
      %s292 = smul.u32 16, %s18
      %p293 = scmp.lt.s32.totalorder %s292, 63
      %s294 = scalar_select %p293, %s292, 63
      %s295 = smul.addr %s294, 8
      %s296 = scalar_lea.vmem %s1, %s295
      %s297 = smul.u32 16, %s18
      %s298 = smul.u32 16, %s18
      %p299 = scmp.lt.s32.totalorder %s298, 63
      %s300 = scalar_select %p299, %s298, 63
      %s301 = smul.addr %s300, 8
      %s302 = scalar_lea.vmem %s7, %s301
      %s303 = smul.u32 16, %s18
      %v305 = vld [vmem:[%s296] sm:$0xff]
      %v306 = vld [vmem:[%s296 + $0x8] sm:$0xff]
      %v307 = vld [vmem:[%s296 + $0x10] sm:$0xff]
      %v308 = vld [vmem:[%s296 + $0x18] sm:$0xff]
      %v309 = vld [vmem:[%s296 + $0x20] sm:$0xff]
      %v310 = vld [vmem:[%s296 + $0x28] sm:$0xff]
      %v311 = vld [vmem:[%s296 + $0x30] sm:$0xff]
      %v312 = vld [vmem:[%s296 + $0x38] sm:$0xff]
      %v313 = vld [vmem:[%s296 + $0x40] sm:$0xff]
      %v314 = vld [vmem:[%s296 + $0x48] sm:$0xff]
      %v315 = vld [vmem:[%s296 + $0x50] sm:$0xff]
      %v316 = vld [vmem:[%s296 + $0x58] sm:$0xff]
      %v317 = vld [vmem:[%s296 + $0x60] sm:$0xff]
      %v318 = vld [vmem:[%s296 + $0x68] sm:$0xff]
      %v319 = vld [vmem:[%s296 + $0x70] sm:$0xff]
      %v320 = vld [vmem:[%s296 + $0x78] sm:$0xff]
      %v321 = vld [vmem:[%s3 + $0x2] sm:$0x1]
      %vm322 = vcmp.eq.s32.totalorder %v305, 1
      %vm323 = vcmp.eq.s32.totalorder %v306, 1
      %vm324 = vcmp.eq.s32.totalorder %v307, 1
      %vm325 = vcmp.eq.s32.totalorder %v308, 1
      %vm326 = vcmp.eq.s32.totalorder %v309, 1
      %vm327 = vcmp.eq.s32.totalorder %v310, 1
      %vm328 = vcmp.eq.s32.totalorder %v311, 1
      %vm329 = vcmp.eq.s32.totalorder %v312, 1
      %vm330 = vcmp.eq.s32.totalorder %v313, 1
      %vm331 = vcmp.eq.s32.totalorder %v314, 1
      %vm332 = vcmp.eq.s32.totalorder %v315, 1
      %vm333 = vcmp.eq.s32.totalorder %v316, 1
      %vm334 = vcmp.eq.s32.totalorder %v317, 1
      %vm335 = vcmp.eq.s32.totalorder %v318, 1
      %vm336 = vcmp.eq.s32.totalorder %v319, 1
      %vm337 = vcmp.eq.s32.totalorder %v320, 1
      %v338 = vld [vmem:[%s3 + $0x1] sm:$0x1]
      %v339 = vsel %vm322, 1, 0
      %v340 = vsel %vm323, 1, 0
      %v341 = vsel %vm324, 1, 0
      %v342 = vsel %vm325, 1, 0
      %v343 = vsel %vm326, 1, 0
      %v344 = vsel %vm327, 1, 0
      %v345 = vsel %vm328, 1, 0
      %v346 = vsel %vm329, 1, 0
      %v347 = vsel %vm330, 1, 0
      %v348 = vsel %vm331, 1, 0
      %v349 = vsel %vm332, 1, 0
      %v350 = vsel %vm333, 1, 0
      %v351 = vsel %vm334, 1, 0
      %v352 = vsel %vm335, 1, 0
      %v353 = vsel %vm336, 1, 0
      %v354 = vsel %vm337, 1, 0
      %355 = vset.pattern.permute.xlu0 0
      %356 = vperm.xlu0 %355, %v339
      %v357 = vpop.permute.xlu0 %356
      %358 = vset.pattern.permute.xlu0 0
      %359 = vperm.xlu0 %358, %v340
      %v360 = vpop.permute.xlu0 %359
      %361 = vset.pattern.permute.xlu0 0
      %362 = vperm.xlu0 %361, %v341
      %v363 = vpop.permute.xlu0 %362
      %364 = vset.pattern.permute.xlu0 0
      %365 = vperm.xlu0 %364, %v342
      %v366 = vpop.permute.xlu0 %365
      %367 = vset.pattern.permute.xlu0 0
      %368 = vperm.xlu0 %367, %v343
      %v369 = vpop.permute.xlu0 %368
      %370 = vset.pattern.permute.xlu0 0
      %371 = vperm.xlu0 %370, %v344
      %v372 = vpop.permute.xlu0 %371
      %373 = vset.pattern.permute.xlu0 0
      %374 = vperm.xlu0 %373, %v345
      %v375 = vpop.permute.xlu0 %374
      %376 = vset.pattern.permute.xlu0 0
      %377 = vperm.xlu0 %376, %v346
      %v378 = vpop.permute.xlu0 %377
      %379 = vset.pattern.permute.xlu0 0
      %380 = vperm.xlu0 %379, %v347
      %v381 = vpop.permute.xlu0 %380
      %382 = vset.pattern.permute.xlu0 0
      %383 = vperm.xlu0 %382, %v348
      %v384 = vpop.permute.xlu0 %383
      %385 = vset.pattern.permute.xlu0 0
      %386 = vperm.xlu0 %385, %v349
      %v387 = vpop.permute.xlu0 %386
      %388 = vset.pattern.permute.xlu0 0
      %389 = vperm.xlu0 %388, %v350
      %v390 = vpop.permute.xlu0 %389
      %391 = vset.pattern.permute.xlu0 0
      %392 = vperm.xlu0 %391, %v351
      %v393 = vpop.permute.xlu0 %392
      %394 = vset.pattern.permute.xlu0 0
      %395 = vperm.xlu0 %394, %v352
      %v396 = vpop.permute.xlu0 %395
      %397 = vset.pattern.permute.xlu0 0
      %398 = vperm.xlu0 %397, %v353
      %v399 = vpop.permute.xlu0 %398
      %400 = vset.pattern.permute.xlu0 0
      %401 = vperm.xlu0 %400, %v354
      %v402 = vpop.permute.xlu0 %401
      %vm403 = vcmp.eq.s32.totalorder %v357, 1
      %vm404 = vcmp.eq.s32.totalorder %v360, 1
      %vm405 = vcmp.eq.s32.totalorder %v363, 1
      %vm406 = vcmp.eq.s32.totalorder %v366, 1
      %vm407 = vcmp.eq.s32.totalorder %v369, 1
      %vm408 = vcmp.eq.s32.totalorder %v372, 1
      %vm409 = vcmp.eq.s32.totalorder %v375, 1
      %vm410 = vcmp.eq.s32.totalorder %v378, 1
      %vm411 = vcmp.eq.s32.totalorder %v381, 1
      %vm412 = vcmp.eq.s32.totalorder %v384, 1
      %vm413 = vcmp.eq.s32.totalorder %v387, 1
      %vm414 = vcmp.eq.s32.totalorder %v390, 1
      %vm415 = vcmp.eq.s32.totalorder %v393, 1
      %vm416 = vcmp.eq.s32.totalorder %v396, 1
      %vm417 = vcmp.eq.s32.totalorder %v399, 1
      %vm418 = vcmp.eq.s32.totalorder %v402, 1
      %v419 = vlaneseq
      %v420 = vshrl.u32 %v419, 7
      %v421 = vsub.s32 0, %v420
      %v422 = vrot.slane %v338, %v421
      %v423 = vlaneseq
      %v424 = vshrl.u32 %v423, 7
      %v425 = vsub.s32 0, %v424
      %v426 = vrot.slane %v321, %v425
      %v427 = vsel %vm403, %v422, %v426
      %v428 = vsel %vm404, %v422, %v426
      %v429 = vsel %vm405, %v422, %v426
      %v430 = vsel %vm406, %v422, %v426
      %v431 = vsel %vm407, %v422, %v426
      %v432 = vsel %vm408, %v422, %v426
      %v433 = vsel %vm409, %v422, %v426
      %v434 = vsel %vm410, %v422, %v426
      %v435 = vsel %vm411, %v422, %v426
      %v436 = vsel %vm412, %v422, %v426
      %v437 = vsel %vm413, %v422, %v426
      %v438 = vsel %vm414, %v422, %v426
      %v439 = vsel %vm415, %v422, %v426
      %v440 = vsel %vm416, %v422, %v426
      %v441 = vsel %vm417, %v422, %v426
      %v442 = vsel %vm418, %v422, %v426
      %vm443 = vcmp.eq.s32.totalorder %v305, 0
      %vm444 = vcmp.eq.s32.totalorder %v306, 0
      %vm445 = vcmp.eq.s32.totalorder %v307, 0
      %vm446 = vcmp.eq.s32.totalorder %v308, 0
      %vm447 = vcmp.eq.s32.totalorder %v309, 0
      %vm448 = vcmp.eq.s32.totalorder %v310, 0
      %vm449 = vcmp.eq.s32.totalorder %v311, 0
      %vm450 = vcmp.eq.s32.totalorder %v312, 0
      %vm451 = vcmp.eq.s32.totalorder %v313, 0
      %vm452 = vcmp.eq.s32.totalorder %v314, 0
      %vm453 = vcmp.eq.s32.totalorder %v315, 0
      %vm454 = vcmp.eq.s32.totalorder %v316, 0
      %vm455 = vcmp.eq.s32.totalorder %v317, 0
      %vm456 = vcmp.eq.s32.totalorder %v318, 0
      %vm457 = vcmp.eq.s32.totalorder %v319, 0
      %vm458 = vcmp.eq.s32.totalorder %v320, 0
      %v459 = vld [vmem:[%s3] sm:$0x1]
      %v460 = vsel %vm443, 1, 0
      %v461 = vsel %vm444, 1, 0
      %v462 = vsel %vm445, 1, 0
      %v463 = vsel %vm446, 1, 0
      %v464 = vsel %vm447, 1, 0
      %v465 = vsel %vm448, 1, 0
      %v466 = vsel %vm449, 1, 0
      %v467 = vsel %vm450, 1, 0
      %v468 = vsel %vm451, 1, 0
      %v469 = vsel %vm452, 1, 0
      %v470 = vsel %vm453, 1, 0
      %v471 = vsel %vm454, 1, 0
      %v472 = vsel %vm455, 1, 0
      %v473 = vsel %vm456, 1, 0
      %v474 = vsel %vm457, 1, 0
      %v475 = vsel %vm458, 1, 0
      %476 = vset.pattern.permute.xlu0 0
      %477 = vperm.xlu0 %476, %v460
      %v478 = vpop.permute.xlu0 %477
      %479 = vset.pattern.permute.xlu0 0
      %480 = vperm.xlu0 %479, %v461
      %v481 = vpop.permute.xlu0 %480
      %482 = vset.pattern.permute.xlu0 0
      %483 = vperm.xlu0 %482, %v462
      %v484 = vpop.permute.xlu0 %483
      %485 = vset.pattern.permute.xlu0 0
      %486 = vperm.xlu0 %485, %v463
      %v487 = vpop.permute.xlu0 %486
      %488 = vset.pattern.permute.xlu0 0
      %489 = vperm.xlu0 %488, %v464
      %v490 = vpop.permute.xlu0 %489
      %491 = vset.pattern.permute.xlu0 0
      %492 = vperm.xlu0 %491, %v465
      %v493 = vpop.permute.xlu0 %492
      %494 = vset.pattern.permute.xlu0 0
      %495 = vperm.xlu0 %494, %v466
      %v496 = vpop.permute.xlu0 %495
      %497 = vset.pattern.permute.xlu0 0
      %498 = vperm.xlu0 %497, %v467
      %v499 = vpop.permute.xlu0 %498
      %500 = vset.pattern.permute.xlu0 0
      %501 = vperm.xlu0 %500, %v468
      %v502 = vpop.permute.xlu0 %501
      %503 = vset.pattern.permute.xlu0 0
      %504 = vperm.xlu0 %503, %v469
      %v505 = vpop.permute.xlu0 %504
      %506 = vset.pattern.permute.xlu0 0
      %507 = vperm.xlu0 %506, %v470
      %v508 = vpop.permute.xlu0 %507
      %509 = vset.pattern.permute.xlu0 0
      %510 = vperm.xlu0 %509, %v471
      %v511 = vpop.permute.xlu0 %510
      %512 = vset.pattern.permute.xlu0 0
      %513 = vperm.xlu0 %512, %v472
      %v514 = vpop.permute.xlu0 %513
      %515 = vset.pattern.permute.xlu0 0
      %516 = vperm.xlu0 %515, %v473
      %v517 = vpop.permute.xlu0 %516
      %518 = vset.pattern.permute.xlu0 0
      %519 = vperm.xlu0 %518, %v474
      %v520 = vpop.permute.xlu0 %519
      %521 = vset.pattern.permute.xlu0 0
      %522 = vperm.xlu0 %521, %v475
      %v523 = vpop.permute.xlu0 %522
      %vm524 = vcmp.eq.s32.totalorder %v478, 1
      %vm525 = vcmp.eq.s32.totalorder %v481, 1
      %vm526 = vcmp.eq.s32.totalorder %v484, 1
      %vm527 = vcmp.eq.s32.totalorder %v487, 1
      %vm528 = vcmp.eq.s32.totalorder %v490, 1
      %vm529 = vcmp.eq.s32.totalorder %v493, 1
      %vm530 = vcmp.eq.s32.totalorder %v496, 1
      %vm531 = vcmp.eq.s32.totalorder %v499, 1
      %vm532 = vcmp.eq.s32.totalorder %v502, 1
      %vm533 = vcmp.eq.s32.totalorder %v505, 1
      %vm534 = vcmp.eq.s32.totalorder %v508, 1
      %vm535 = vcmp.eq.s32.totalorder %v511, 1
      %vm536 = vcmp.eq.s32.totalorder %v514, 1
      %vm537 = vcmp.eq.s32.totalorder %v517, 1
      %vm538 = vcmp.eq.s32.totalorder %v520, 1
      %vm539 = vcmp.eq.s32.totalorder %v523, 1
      %v540 = vlaneseq
      %v541 = vshrl.u32 %v540, 7
      %v542 = vsub.s32 0, %v541
      %v543 = vrot.slane %v459, %v542
      %v544 = vsel %vm524, %v543, %v427
      %v545 = vsel %vm525, %v543, %v428
      %v546 = vsel %vm526, %v543, %v429
      %v547 = vsel %vm527, %v543, %v430
      %v548 = vsel %vm528, %v543, %v431
      %v549 = vsel %vm529, %v543, %v432
      %v550 = vsel %vm530, %v543, %v433
      %v551 = vsel %vm531, %v543, %v434
      %v552 = vsel %vm532, %v543, %v435
      %v553 = vsel %vm533, %v543, %v436
      %v554 = vsel %vm534, %v543, %v437
      %v555 = vsel %vm535, %v543, %v438
      %v556 = vsel %vm536, %v543, %v439
      %v557 = vsel %vm537, %v543, %v440
      %v558 = vsel %vm538, %v543, %v441
      %v559 = vsel %vm539, %v543, %v442
      %v560 = vld [vmem:[%s290] sm:$0xf]
      %v561 = vld [vmem:[%s290 + $0x4] sm:$0xf]
      %v562 = vld [vmem:[%s290 + $0x8] sm:$0xf]
      %v563 = vld [vmem:[%s290 + $0xc] sm:$0xf]
      %v564 = vld [vmem:[%s290 + $0x10] sm:$0xf]
      %v565 = vld [vmem:[%s290 + $0x14] sm:$0xf]
      %v566 = vld [vmem:[%s290 + $0x18] sm:$0xf]
      %v567 = vld [vmem:[%s290 + $0x1c] sm:$0xf]
      %v568 = vld [vmem:[%s290 + $0x20] sm:$0xf]
      %v569 = vld [vmem:[%s290 + $0x24] sm:$0xf]
      %v570 = vld [vmem:[%s290 + $0x28] sm:$0xf]
      %v571 = vld [vmem:[%s290 + $0x2c] sm:$0xf]
      %v572 = vld [vmem:[%s290 + $0x30] sm:$0xf]
      %v573 = vld [vmem:[%s290 + $0x34] sm:$0xf]
      %v574 = vld [vmem:[%s290 + $0x38] sm:$0xf]
      %v575 = vld [vmem:[%s290 + $0x3c] sm:$0xf]
      %v576 = vld [vmem:[%s2] sm:$0xf]
      %v577 = vld [vmem:[%s2 + $0x4] sm:$0xf]
      %v578 = vld [vmem:[%s2 + $0x8] sm:$0xf]
      %v579 = vld [vmem:[%s2 + $0xc] sm:$0xf]
      %v596 = vunpack.c.l.b16 %v560
      %v597 = vunpack.c.l.b16 %v561
      %v598 = vunpack.c.l.b16 %v562
      %v599 = vunpack.c.l.b16 %v563
      %v600 = vunpack.c.l.b16 %v564
      %v601 = vunpack.c.l.b16 %v565
      %v602 = vunpack.c.l.b16 %v566
      %v603 = vunpack.c.l.b16 %v567
      %v604 = vunpack.c.l.b16 %v568
      %v605 = vunpack.c.l.b16 %v569
      %v606 = vunpack.c.l.b16 %v570
      %v607 = vunpack.c.l.b16 %v571
      %v608 = vunpack.c.l.b16 %v572
      %v609 = vunpack.c.l.b16 %v573
      %v610 = vunpack.c.l.b16 %v574
      %v611 = vunpack.c.l.b16 %v575
      %v612 = vpack.c.b16 %v597, %v596
      %v613 = vpack.c.b16 %v599, %v598
      %v614 = vpack.c.b16 %v601, %v600
      %v615 = vpack.c.b16 %v603, %v602
      %v616 = vpack.c.b16 %v605, %v604
      %v617 = vpack.c.b16 %v607, %v606
      %v618 = vpack.c.b16 %v609, %v608
      %v619 = vpack.c.b16 %v611, %v610
      %v624 = vunpack.c.l.b16 %v576
      %v625 = vunpack.c.l.b16 %v577
      %v626 = vunpack.c.l.b16 %v578
      %v627 = vunpack.c.l.b16 %v579
      %v628 = vpack.c.b16 %v625, %v624
      %v629 = vpack.c.b16 %v627, %v626
      %vm632 = vcmask 261120
      %v634 = vsel %vm632, %v612, 0
      %v637 = vsel %vm632, %v613, 0
      %v640 = vsel %vm632, %v614, 0
      %v643 = vsel %vm632, %v615, 0
      %v646 = vsel %vm632, %v616, 0
      %v649 = vsel %vm632, %v617, 0
      %v652 = vsel %vm632, %v618, 0
      %v655 = vsel %vm632, %v619, 0
      %657 = vmatprep.subr.bf16.mxu0 0
      %658 = vmatpush1.bf16.msra.mxu0 %v628
      %659 = vmatprep.subr.bf16.mxu0 0
      %660 = vmatpush1.bf16.msra.mxu0 %v629
      %661 = vmatprep.subr.bf16.mxu0 0
      %662 = vmatpush1.bf16.msra.mxu0 0
      %663 = vmatprep.subr.bf16.mxu0 0
      %664 = vmatpush1.bf16.msra.mxu0 0
      %665 = vmatprep.subr.bf16.mxu0 0
      %666 = vmatpush1.bf16.msra.mxu0 0
      %667 = vmatprep.subr.bf16.mxu0 0
      %668 = vmatpush1.bf16.msra.mxu0 0
      %669 = vmatprep.subr.bf16.mxu0 0
      %670 = vmatpush1.bf16.msra.mxu0 0
      %671 = vmatprep.subr.bf16.mxu0 0
      %672 = vmatpush1.bf16.msra.mxu0 0
      %673 = vmatprep.subr.bf16.mxu0 0
      %674 = vmatpush1.bf16.msra.mxu0 0
      %675 = vmatprep.subr.bf16.mxu0 0
      %676 = vmatpush1.bf16.msra.mxu0 0
      %677 = vmatprep.subr.bf16.mxu0 0
      %678 = vmatpush1.bf16.msra.mxu0 0
      %679 = vmatprep.subr.bf16.mxu0 0
      %680 = vmatpush1.bf16.msra.mxu0 0
      %681 = vmatprep.subr.bf16.mxu0 0
      %682 = vmatpush1.bf16.msra.mxu0 0
      %683 = vmatprep.subr.bf16.mxu0 0
      %684 = vmatpush1.bf16.msra.mxu0 0
      %685 = vmatprep.subr.bf16.mxu0 0
      %686 = vmatpush1.bf16.msra.mxu0 0
      %687 = vmatprep.subr.bf16.mxu0 0
      %688 = vmatpush1.bf16.msra.mxu0 0
      %689 = vmatprep.mubr.bf16.mxu0 0
      %690 = vmatmul.mubr.bf16.gmra.mrb[0].mxu0 %v634
      %v691 = vpop.f32.mrb[0].mxu0
      %v692 = vadd.f32 %v544, %v691
      %v693 = vpop.f32.mrb[0].mxu0
      %v694 = vpop.f32.mrb[0].mxu0
      %v695 = vadd.f32 %v545, %v694
      %v696 = vpop.f32.mrb[0].mxu0
      %697 = vmatprep.mubr.bf16.mxu0 0
      %698 = vmatmul.mubr.bf16.gmra.mrb[0].mxu0 %v637
      %v699 = vpop.f32.mrb[0].mxu0
      %v700 = vadd.f32 %v546, %v699
      %v701 = vpop.f32.mrb[0].mxu0
      %v702 = vpop.f32.mrb[0].mxu0
      %v703 = vadd.f32 %v547, %v702
      %v704 = vpop.f32.mrb[0].mxu0
      %705 = vmatprep.mubr.bf16.mxu0 0
      %706 = vmatmul.mubr.bf16.gmra.mrb[0].mxu0 %v640
      %v707 = vpop.f32.mrb[0].mxu0
      %v708 = vadd.f32 %v548, %v707
      %v709 = vpop.f32.mrb[0].mxu0
      %v710 = vpop.f32.mrb[0].mxu0
      %v711 = vadd.f32 %v549, %v710
      %v712 = vpop.f32.mrb[0].mxu0
      %713 = vmatprep.mubr.bf16.mxu0 0
      %714 = vmatmul.mubr.bf16.gmra.mrb[0].mxu0 %v643
      %v715 = vpop.f32.mrb[0].mxu0
      %v716 = vadd.f32 %v550, %v715
      %v717 = vpop.f32.mrb[0].mxu0
      %v718 = vpop.f32.mrb[0].mxu0
      %v719 = vadd.f32 %v551, %v718
      %v720 = vpop.f32.mrb[0].mxu0
      %721 = vmatprep.mubr.bf16.mxu0 0
      %722 = vmatmul.mubr.bf16.gmra.mrb[0].mxu0 %v646
      %v723 = vpop.f32.mrb[0].mxu0
      %v724 = vadd.f32 %v552, %v723
      %v725 = vpop.f32.mrb[0].mxu0
      %v726 = vpop.f32.mrb[0].mxu0
      %v727 = vadd.f32 %v553, %v726
      %v728 = vpop.f32.mrb[0].mxu0
      %729 = vmatprep.mubr.bf16.mxu0 0
      %730 = vmatmul.mubr.bf16.gmra.mrb[0].mxu0 %v649
      %v731 = vpop.f32.mrb[0].mxu0
      %v732 = vadd.f32 %v554, %v731
      %v733 = vpop.f32.mrb[0].mxu0
      %v734 = vpop.f32.mrb[0].mxu0
      %v735 = vadd.f32 %v555, %v734
      %v736 = vpop.f32.mrb[0].mxu0
      %737 = vmatprep.mubr.bf16.mxu0 0
      %738 = vmatmul.mubr.bf16.gmra.mrb[0].mxu0 %v652
      %v739 = vpop.f32.mrb[0].mxu0
      %v740 = vadd.f32 %v556, %v739
      %v741 = vpop.f32.mrb[0].mxu0
      %v742 = vpop.f32.mrb[0].mxu0
      %v743 = vadd.f32 %v557, %v742
      %v744 = vpop.f32.mrb[0].mxu0
      %745 = vmatprep.mubr.bf16.mxu0 0
      %746 = vmatmul.mubr.bf16.gmra.mrb[0].mxu0 %v655
      %v747 = vpop.f32.mrb[0].mxu0
      %v748 = vadd.f32 %v558, %v747
      %v749 = vpop.f32.mrb[0].mxu0
      %v750 = vpop.f32.mrb[0].mxu0
      %v751 = vadd.f32 %v559, %v750
      %v752 = vpop.f32.mrb[0].mxu0
      %753 = vdwg.mxu0
      %v754 = vld [vmem:[%s4] sm:$0x1]
      %v756 = vlaneseq
      %v757 = vshrl.u32 %v756, 7
      %v758 = vsub.s32 0, %v757
      %v759 = vrot.slane %v754, %v758
      %v761 = vadd.f32 %v692, %v759
      %v762 = vadd.f32 %v695, %v759
      %v763 = vadd.f32 %v700, %v759
      %v764 = vadd.f32 %v703, %v759
      %v765 = vadd.f32 %v708, %v759
      %v766 = vadd.f32 %v711, %v759
      %v767 = vadd.f32 %v716, %v759
      %v768 = vadd.f32 %v719, %v759
      %v769 = vadd.f32 %v724, %v759
      %v770 = vadd.f32 %v727, %v759
      %v771 = vadd.f32 %v732, %v759
      %v772 = vadd.f32 %v735, %v759
      %v773 = vadd.f32 %v740, %v759
      %v774 = vadd.f32 %v743, %v759
      %v775 = vadd.f32 %v748, %v759
      %v776 = vadd.f32 %v751, %v759
      %vm777 = vcmask 523264
      %v778 = vsel %vm777, %v761, 0.0
      %779 = vadd.xlane.f32.xlu0 %v778
      %v780 = vpop.xlane.xlu0 %779
      %v781 = vsel %vm777, %v762, 0.0
      %782 = vadd.xlane.f32.xlu0 %v781
      %v783 = vpop.xlane.xlu0 %782
      %v784 = vsel %vm777, %v763, 0.0
      %785 = vadd.xlane.f32.xlu0 %v784
      %v786 = vpop.xlane.xlu0 %785
      %v787 = vsel %vm777, %v764, 0.0
      %788 = vadd.xlane.f32.xlu0 %v787
      %v789 = vpop.xlane.xlu0 %788
      %v790 = vsel %vm777, %v765, 0.0
      %791 = vadd.xlane.f32.xlu0 %v790
      %v792 = vpop.xlane.xlu0 %791
      %v793 = vsel %vm777, %v766, 0.0
      %794 = vadd.xlane.f32.xlu0 %v793
      %v795 = vpop.xlane.xlu0 %794
      %v796 = vsel %vm777, %v767, 0.0
      %797 = vadd.xlane.f32.xlu0 %v796
      %v798 = vpop.xlane.xlu0 %797
      %v799 = vsel %vm777, %v768, 0.0
      %800 = vadd.xlane.f32.xlu0 %v799
      %v801 = vpop.xlane.xlu0 %800
      %v802 = vsel %vm777, %v769, 0.0
      %803 = vadd.xlane.f32.xlu0 %v802
      %v804 = vpop.xlane.xlu0 %803
      %v805 = vsel %vm777, %v770, 0.0
      %806 = vadd.xlane.f32.xlu0 %v805
      %v807 = vpop.xlane.xlu0 %806
      %v808 = vsel %vm777, %v771, 0.0
      %809 = vadd.xlane.f32.xlu0 %v808
      %v810 = vpop.xlane.xlu0 %809
      %v811 = vsel %vm777, %v772, 0.0
      %812 = vadd.xlane.f32.xlu0 %v811
      %v813 = vpop.xlane.xlu0 %812
      %v814 = vsel %vm777, %v773, 0.0
      %815 = vadd.xlane.f32.xlu0 %v814
      %v816 = vpop.xlane.xlu0 %815
      %v817 = vsel %vm777, %v774, 0.0
      %818 = vadd.xlane.f32.xlu0 %v817
      %v819 = vpop.xlane.xlu0 %818
      %v820 = vsel %vm777, %v775, 0.0
      %821 = vadd.xlane.f32.xlu0 %v820
      %v822 = vpop.xlane.xlu0 %821
      %v823 = vsel %vm777, %v776, 0.0
      %824 = vadd.xlane.f32.xlu0 %v823
      %v825 = vpop.xlane.xlu0 %824
      %v826 = vmul.f32 %v761, %v761
      %v827 = vmul.f32 %v762, %v762
      %v828 = vmul.f32 %v763, %v763
      %v829 = vmul.f32 %v764, %v764
      %v830 = vmul.f32 %v765, %v765
      %v831 = vmul.f32 %v766, %v766
      %v832 = vmul.f32 %v767, %v767
      %v833 = vmul.f32 %v768, %v768
      %v834 = vmul.f32 %v769, %v769
      %v835 = vmul.f32 %v770, %v770
      %v836 = vmul.f32 %v771, %v771
      %v837 = vmul.f32 %v772, %v772
      %v838 = vmul.f32 %v773, %v773
      %v839 = vmul.f32 %v774, %v774
      %v840 = vmul.f32 %v775, %v775
      %v841 = vmul.f32 %v776, %v776
      %v842 = vsel %vm777, %v826, 0.0
      %843 = vadd.xlane.f32.xlu0 %v842
      %v844 = vpop.xlane.xlu0 %843
      %v845 = vsel %vm777, %v827, 0.0
      %846 = vadd.xlane.f32.xlu0 %v845
      %v847 = vpop.xlane.xlu0 %846
      %v848 = vsel %vm777, %v828, 0.0
      %849 = vadd.xlane.f32.xlu0 %v848
      %v850 = vpop.xlane.xlu0 %849
      %v851 = vsel %vm777, %v829, 0.0
      %852 = vadd.xlane.f32.xlu0 %v851
      %v853 = vpop.xlane.xlu0 %852
      %v854 = vsel %vm777, %v830, 0.0
      %855 = vadd.xlane.f32.xlu0 %v854
      %v856 = vpop.xlane.xlu0 %855
      %v857 = vsel %vm777, %v831, 0.0
      %858 = vadd.xlane.f32.xlu0 %v857
      %v859 = vpop.xlane.xlu0 %858
      %v860 = vsel %vm777, %v832, 0.0
      %861 = vadd.xlane.f32.xlu0 %v860
      %v862 = vpop.xlane.xlu0 %861
      %v863 = vsel %vm777, %v833, 0.0
      %864 = vadd.xlane.f32.xlu0 %v863
      %v865 = vpop.xlane.xlu0 %864
      %v866 = vsel %vm777, %v834, 0.0
      %867 = vadd.xlane.f32.xlu0 %v866
      %v868 = vpop.xlane.xlu0 %867
      %v869 = vsel %vm777, %v835, 0.0
      %870 = vadd.xlane.f32.xlu0 %v869
      %v871 = vpop.xlane.xlu0 %870
      %v872 = vsel %vm777, %v836, 0.0
      %873 = vadd.xlane.f32.xlu0 %v872
      %v874 = vpop.xlane.xlu0 %873
      %v875 = vsel %vm777, %v837, 0.0
      %876 = vadd.xlane.f32.xlu0 %v875
      %v877 = vpop.xlane.xlu0 %876
      %v878 = vsel %vm777, %v838, 0.0
      %879 = vadd.xlane.f32.xlu0 %v878
      %v880 = vpop.xlane.xlu0 %879
      %v881 = vsel %vm777, %v839, 0.0
      %882 = vadd.xlane.f32.xlu0 %v881
      %v883 = vpop.xlane.xlu0 %882
      %v884 = vsel %vm777, %v840, 0.0
      %885 = vadd.xlane.f32.xlu0 %v884
      %v886 = vpop.xlane.xlu0 %885
      %v887 = vsel %vm777, %v841, 0.0
      %888 = vadd.xlane.f32.xlu0 %v887
      %v889 = vpop.xlane.xlu0 %888
      %v890 = vmul.f32 %v780, 0.015625
      %v891 = vmul.f32 %v783, 0.015625
      %v892 = vmul.f32 %v786, 0.015625
      %v893 = vmul.f32 %v789, 0.015625
      %v894 = vmul.f32 %v792, 0.015625
      %v895 = vmul.f32 %v795, 0.015625
      %v896 = vmul.f32 %v798, 0.015625
      %v897 = vmul.f32 %v801, 0.015625
      %v898 = vmul.f32 %v804, 0.015625
      %v899 = vmul.f32 %v807, 0.015625
      %v900 = vmul.f32 %v810, 0.015625
      %v901 = vmul.f32 %v813, 0.015625
      %v902 = vmul.f32 %v816, 0.015625
      %v903 = vmul.f32 %v819, 0.015625
      %v904 = vmul.f32 %v822, 0.015625
      %v905 = vmul.f32 %v825, 0.015625
      %v906 = vmul.f32 %v844, 0.015625
      %v907 = vmul.f32 %v847, 0.015625
      %v908 = vmul.f32 %v850, 0.015625
      %v909 = vmul.f32 %v853, 0.015625
      %v910 = vmul.f32 %v856, 0.015625
      %v911 = vmul.f32 %v859, 0.015625
      %v912 = vmul.f32 %v862, 0.015625
      %v913 = vmul.f32 %v865, 0.015625
      %v914 = vmul.f32 %v868, 0.015625
      %v915 = vmul.f32 %v871, 0.015625
      %v916 = vmul.f32 %v874, 0.015625
      %v917 = vmul.f32 %v877, 0.015625
      %v918 = vmul.f32 %v880, 0.015625
      %v919 = vmul.f32 %v883, 0.015625
      %v920 = vmul.f32 %v886, 0.015625
      %v921 = vmul.f32 %v889, 0.015625
      %v922 = vmul.f32 %v890, %v890
      %v923 = vmul.f32 %v891, %v891
      %v924 = vmul.f32 %v892, %v892
      %v925 = vmul.f32 %v893, %v893
      %v926 = vmul.f32 %v894, %v894
      %v927 = vmul.f32 %v895, %v895
      %v928 = vmul.f32 %v896, %v896
      %v929 = vmul.f32 %v897, %v897
      %v930 = vmul.f32 %v898, %v898
      %v931 = vmul.f32 %v899, %v899
      %v932 = vmul.f32 %v900, %v900
      %v933 = vmul.f32 %v901, %v901
      %v934 = vmul.f32 %v902, %v902
      %v935 = vmul.f32 %v903, %v903
      %v936 = vmul.f32 %v904, %v904
      %v937 = vmul.f32 %v905, %v905
      %v938 = vsub.f32 %v906, %v922
      %v939 = vsub.f32 %v907, %v923
      %v940 = vsub.f32 %v908, %v924
      %v941 = vsub.f32 %v909, %v925
      %v942 = vsub.f32 %v910, %v926
      %v943 = vsub.f32 %v911, %v927
      %v944 = vsub.f32 %v912, %v928
      %v945 = vsub.f32 %v913, %v929
      %v946 = vsub.f32 %v914, %v930
      %v947 = vsub.f32 %v915, %v931
      %v948 = vsub.f32 %v916, %v932
      %v949 = vsub.f32 %v917, %v933
      %v950 = vsub.f32 %v918, %v934
      %v951 = vsub.f32 %v919, %v935
      %v952 = vsub.f32 %v920, %v936
      %v953 = vsub.f32 %v921, %v937
      %v954 = vmax.f32 %v938, 0.0
      %v955 = vmax.f32 %v939, 0.0
      %v956 = vmax.f32 %v940, 0.0
      %v957 = vmax.f32 %v941, 0.0
      %v958 = vmax.f32 %v942, 0.0
      %v959 = vmax.f32 %v943, 0.0
      %v960 = vmax.f32 %v944, 0.0
      %v961 = vmax.f32 %v945, 0.0
      %v962 = vmax.f32 %v946, 0.0
      %v963 = vmax.f32 %v947, 0.0
      %v964 = vmax.f32 %v948, 0.0
      %v965 = vmax.f32 %v949, 0.0
      %v966 = vmax.f32 %v950, 0.0
      %v967 = vmax.f32 %v951, 0.0
      %v968 = vmax.f32 %v952, 0.0
      %v969 = vmax.f32 %v953, 0.0
      %v970 = vsub.f32 %v761, %v890
      %v971 = vsub.f32 %v762, %v891
      %v972 = vsub.f32 %v763, %v892
      %v973 = vsub.f32 %v764, %v893
      %v974 = vsub.f32 %v765, %v894
      %v975 = vsub.f32 %v766, %v895
      %v976 = vsub.f32 %v767, %v896
      %v977 = vsub.f32 %v768, %v897
      %v978 = vsub.f32 %v769, %v898
      %v979 = vsub.f32 %v770, %v899
      %v980 = vsub.f32 %v771, %v900
      %v981 = vsub.f32 %v772, %v901
      %v982 = vsub.f32 %v773, %v902
      %v983 = vsub.f32 %v774, %v903
      %v984 = vsub.f32 %v775, %v904
      %v985 = vsub.f32 %v776, %v905
      %v986 = vadd.f32 %v954, 1e-05
      %v987 = vadd.f32 %v955, 1e-05
      %v988 = vadd.f32 %v956, 1e-05
      %v989 = vadd.f32 %v957, 1e-05
      %v990 = vadd.f32 %v958, 1e-05
      %v991 = vadd.f32 %v959, 1e-05
      %v992 = vadd.f32 %v960, 1e-05
      %v993 = vadd.f32 %v961, 1e-05
      %v994 = vadd.f32 %v962, 1e-05
      %v995 = vadd.f32 %v963, 1e-05
      %v996 = vadd.f32 %v964, 1e-05
      %v997 = vadd.f32 %v965, 1e-05
      %v998 = vadd.f32 %v966, 1e-05
      %v999 = vadd.f32 %v967, 1e-05
      %v1000 = vadd.f32 %v968, 1e-05
      %v1001 = vadd.f32 %v969, 1e-05
      %v1002 = vrsqrt.pop %v986
      %v1003 = vrsqrt.pop %v987
      %v1004 = vrsqrt.pop %v988
      %v1005 = vrsqrt.pop %v989
      %v1006 = vrsqrt.pop %v990
      %v1007 = vrsqrt.pop %v991
      %v1008 = vrsqrt.pop %v992
      %v1009 = vrsqrt.pop %v993
      %v1010 = vrsqrt.pop %v994
      %v1011 = vrsqrt.pop %v995
      %v1012 = vrsqrt.pop %v996
      %v1013 = vrsqrt.pop %v997
      %v1014 = vrsqrt.pop %v998
      %v1015 = vrsqrt.pop %v999
      %v1016 = vrsqrt.pop %v1000
      %v1017 = vrsqrt.pop %v1001
      %v1018 = vmul.f32 %v970, %v1002
      %v1019 = vmul.f32 %v971, %v1003
      %v1020 = vmul.f32 %v972, %v1004
      %v1021 = vmul.f32 %v973, %v1005
      %v1022 = vmul.f32 %v974, %v1006
      %v1023 = vmul.f32 %v975, %v1007
      %v1024 = vmul.f32 %v976, %v1008
      %v1025 = vmul.f32 %v977, %v1009
      %v1026 = vmul.f32 %v978, %v1010
      %v1027 = vmul.f32 %v979, %v1011
      %v1028 = vmul.f32 %v980, %v1012
      %v1029 = vmul.f32 %v981, %v1013
      %v1030 = vmul.f32 %v982, %v1014
      %v1031 = vmul.f32 %v983, %v1015
      %v1032 = vmul.f32 %v984, %v1016
      %v1033 = vmul.f32 %v985, %v1017
      %v1034 = vmax.f32 %v1018, 0.0
      %v1035 = vmax.f32 %v1019, 0.0
      %v1036 = vmax.f32 %v1020, 0.0
      %v1037 = vmax.f32 %v1021, 0.0
      %v1038 = vmax.f32 %v1022, 0.0
      %v1039 = vmax.f32 %v1023, 0.0
      %v1040 = vmax.f32 %v1024, 0.0
      %v1041 = vmax.f32 %v1025, 0.0
      %v1042 = vmax.f32 %v1026, 0.0
      %v1043 = vmax.f32 %v1027, 0.0
      %v1044 = vmax.f32 %v1028, 0.0
      %v1045 = vmax.f32 %v1029, 0.0
      %v1046 = vmax.f32 %v1030, 0.0
      %v1047 = vmax.f32 %v1031, 0.0
      %v1048 = vmax.f32 %v1032, 0.0
      %v1049 = vmax.f32 %v1033, 0.0
      %v1050 = vpack.c.bf16 %v1035, %v1034
      %v1051 = vpack.c.bf16 %v1037, %v1036
      %v1052 = vpack.c.bf16 %v1039, %v1038
      %v1053 = vpack.c.bf16 %v1041, %v1040
      %v1054 = vpack.c.bf16 %v1043, %v1042
      %v1055 = vpack.c.bf16 %v1045, %v1044
      %v1056 = vpack.c.bf16 %v1047, %v1046
      %v1057 = vpack.c.bf16 %v1049, %v1048
      %v1058 = vld [vmem:[%s5] sm:$0xf]
      %v1059 = vld [vmem:[%s5 + $0x4] sm:$0xf]
      %v1060 = vld [vmem:[%s5 + $0x8] sm:$0xf]
      %v1061 = vld [vmem:[%s5 + $0xc] sm:$0xf]
      %v1062 = vld [vmem:[%s5 + $0x10] sm:$0xf]
      %v1063 = vld [vmem:[%s5 + $0x14] sm:$0xf]
      %v1064 = vld [vmem:[%s5 + $0x18] sm:$0xf]
      %v1065 = vld [vmem:[%s5 + $0x1c] sm:$0xf]
      %v1066 = vld [vmem:[%s6] sm:$0x1]
      %v1068 = vlaneseq
      %v1069 = vshrl.u32 %v1068, 7
      %v1070 = vsub.s32 0, %v1069
      %v1071 = vrot.slane %v1066, %v1070
      %v1081 = vunpack.c.l.b16 %v1058
      %v1082 = vunpack.c.l.b16 %v1059
      %v1083 = vunpack.c.l.b16 %v1060
      %v1084 = vunpack.c.l.b16 %v1061
      %v1085 = vunpack.c.l.b16 %v1062
      %v1086 = vunpack.c.l.b16 %v1063
      %v1087 = vunpack.c.l.b16 %v1064
      %v1088 = vunpack.c.l.b16 %v1065
      %v1089 = vpack.c.b16 %v1082, %v1081
      %v1090 = vpack.c.b16 %v1084, %v1083
      %v1091 = vpack.c.b16 %v1086, %v1085
      %v1092 = vpack.c.b16 %v1088, %v1087
      %v1098 = vsel %vm777, %v1050, 0
      %v1101 = vsel %vm777, %v1051, 0
      %v1104 = vsel %vm777, %v1052, 0
      %v1107 = vsel %vm777, %v1053, 0
      %v1110 = vsel %vm777, %v1054, 0
      %v1113 = vsel %vm777, %v1055, 0
      %v1116 = vsel %vm777, %v1056, 0
      %v1119 = vsel %vm777, %v1057, 0
      %1121 = vmatprep.subr.bf16.mxu0 0
      %1122 = vmatpush1.bf16.msra.mxu0 %v1089
      %1123 = vmatprep.subr.bf16.mxu0 0
      %1124 = vmatpush1.bf16.msra.mxu0 %v1090
      %1125 = vmatprep.subr.bf16.mxu0 0
      %1126 = vmatpush1.bf16.msra.mxu0 %v1091
      %1127 = vmatprep.subr.bf16.mxu0 0
      %1128 = vmatpush1.bf16.msra.mxu0 %v1092
      %1129 = vmatprep.subr.bf16.mxu0 0
      %1130 = vmatpush1.bf16.msra.mxu0 0
      %1131 = vmatprep.subr.bf16.mxu0 0
      %1132 = vmatpush1.bf16.msra.mxu0 0
      %1133 = vmatprep.subr.bf16.mxu0 0
      %1134 = vmatpush1.bf16.msra.mxu0 0
      %1135 = vmatprep.subr.bf16.mxu0 0
      %1136 = vmatpush1.bf16.msra.mxu0 0
      %1137 = vmatprep.subr.bf16.mxu0 0
      %1138 = vmatpush1.bf16.msra.mxu0 0
      %1139 = vmatprep.subr.bf16.mxu0 0
      %1140 = vmatpush1.bf16.msra.mxu0 0
      %1141 = vmatprep.subr.bf16.mxu0 0
      %1142 = vmatpush1.bf16.msra.mxu0 0
      %1143 = vmatprep.subr.bf16.mxu0 0
      %1144 = vmatpush1.bf16.msra.mxu0 0
      %1145 = vmatprep.subr.bf16.mxu0 0
      %1146 = vmatpush1.bf16.msra.mxu0 0
      %1147 = vmatprep.subr.bf16.mxu0 0
      %1148 = vmatpush1.bf16.msra.mxu0 0
      %1149 = vmatprep.subr.bf16.mxu0 0
      %1150 = vmatpush1.bf16.msra.mxu0 0
      %1151 = vmatprep.subr.bf16.mxu0 0
      %1152 = vmatpush1.bf16.msra.mxu0 0
      %1153 = vmatprep.mubr.bf16.mxu0 0
      %1154 = vmatmul.mubr.bf16.gmra.mrb[0].mxu0 %v1098
      %v1155 = vpop.f32.mrb[0].mxu0
      %v1156 = vadd.f32 %v1071, %v1155
      %v1157 = vpop.f32.mrb[0].mxu0
      %v1158 = vpop.f32.mrb[0].mxu0
      %v1159 = vadd.f32 %v1071, %v1158
      %v1160 = vpop.f32.mrb[0].mxu0
      %1161 = vmatprep.mubr.bf16.mxu0 0
      %1162 = vmatmul.mubr.bf16.gmra.mrb[0].mxu0 %v1101
      %v1163 = vpop.f32.mrb[0].mxu0
      %v1164 = vadd.f32 %v1071, %v1163
      %v1165 = vpop.f32.mrb[0].mxu0
      %v1166 = vpop.f32.mrb[0].mxu0
      %v1167 = vadd.f32 %v1071, %v1166
      %v1168 = vpop.f32.mrb[0].mxu0
      %1169 = vmatprep.mubr.bf16.mxu0 0
      %1170 = vmatmul.mubr.bf16.gmra.mrb[0].mxu0 %v1104
      %v1171 = vpop.f32.mrb[0].mxu0
      %v1172 = vadd.f32 %v1071, %v1171
      %v1173 = vpop.f32.mrb[0].mxu0
      %v1174 = vpop.f32.mrb[0].mxu0
      %v1175 = vadd.f32 %v1071, %v1174
      %v1176 = vpop.f32.mrb[0].mxu0
      %1177 = vmatprep.mubr.bf16.mxu0 0
      %1178 = vmatmul.mubr.bf16.gmra.mrb[0].mxu0 %v1107
      %v1179 = vpop.f32.mrb[0].mxu0
      %v1180 = vadd.f32 %v1071, %v1179
      %v1181 = vpop.f32.mrb[0].mxu0
      %v1182 = vpop.f32.mrb[0].mxu0
      %v1183 = vadd.f32 %v1071, %v1182
      %v1184 = vpop.f32.mrb[0].mxu0
      %1185 = vmatprep.mubr.bf16.mxu0 0
      %1186 = vmatmul.mubr.bf16.gmra.mrb[0].mxu0 %v1110
      %v1187 = vpop.f32.mrb[0].mxu0
      %v1188 = vadd.f32 %v1071, %v1187
      %v1189 = vpop.f32.mrb[0].mxu0
      %v1190 = vpop.f32.mrb[0].mxu0
      %v1191 = vadd.f32 %v1071, %v1190
      %v1192 = vpop.f32.mrb[0].mxu0
      %1193 = vmatprep.mubr.bf16.mxu0 0
      %1194 = vmatmul.mubr.bf16.gmra.mrb[0].mxu0 %v1113
      %v1195 = vpop.f32.mrb[0].mxu0
      %v1196 = vadd.f32 %v1071, %v1195
      %v1197 = vpop.f32.mrb[0].mxu0
      %v1198 = vpop.f32.mrb[0].mxu0
      %v1199 = vadd.f32 %v1071, %v1198
      %v1200 = vpop.f32.mrb[0].mxu0
      %1201 = vmatprep.mubr.bf16.mxu0 0
      %1202 = vmatmul.mubr.bf16.gmra.mrb[0].mxu0 %v1116
      %v1203 = vpop.f32.mrb[0].mxu0
      %v1204 = vadd.f32 %v1071, %v1203
      %v1205 = vpop.f32.mrb[0].mxu0
      %v1206 = vpop.f32.mrb[0].mxu0
      %v1207 = vadd.f32 %v1071, %v1206
      %v1208 = vpop.f32.mrb[0].mxu0
      %1209 = vmatprep.mubr.bf16.mxu0 0
      %1210 = vmatmul.mubr.bf16.gmra.mrb[0].mxu0 %v1119
      %v1211 = vpop.f32.mrb[0].mxu0
      %v1212 = vadd.f32 %v1071, %v1211
      %v1213 = vpop.f32.mrb[0].mxu0
      %v1214 = vpop.f32.mrb[0].mxu0
      %v1215 = vadd.f32 %v1071, %v1214
      %v1216 = vpop.f32.mrb[0].mxu0
      %1217 = vdwg.mxu0
      %vm1218 = vcmask 130048
      %1219 = vst.msk [vmem:[%s302] sm:$0xff] %vm1218, %v1156
      %1220 = vst.msk [vmem:[%s302 + $0x8] sm:$0xff] %vm1218, %v1159
      %1221 = vst.msk [vmem:[%s302 + $0x10] sm:$0xff] %vm1218, %v1164
      %1222 = vst.msk [vmem:[%s302 + $0x18] sm:$0xff] %vm1218, %v1167
      %1223 = vst.msk [vmem:[%s302 + $0x20] sm:$0xff] %vm1218, %v1172
      %1224 = vst.msk [vmem:[%s302 + $0x28] sm:$0xff] %vm1218, %v1175
      %1225 = vst.msk [vmem:[%s302 + $0x30] sm:$0xff] %vm1218, %v1180
      %1226 = vst.msk [vmem:[%s302 + $0x38] sm:$0xff] %vm1218, %v1183
      %1227 = vst.msk [vmem:[%s302 + $0x40] sm:$0xff] %vm1218, %v1188
      %1228 = vst.msk [vmem:[%s302 + $0x48] sm:$0xff] %vm1218, %v1191
      %1229 = vst.msk [vmem:[%s302 + $0x50] sm:$0xff] %vm1218, %v1196
      %1230 = vst.msk [vmem:[%s302 + $0x58] sm:$0xff] %vm1218, %v1199
      %1231 = vst.msk [vmem:[%s302 + $0x60] sm:$0xff] %vm1218, %v1204
      %1232 = vst.msk [vmem:[%s302 + $0x68] sm:$0xff] %vm1218, %v1207
      %1233 = vst.msk [vmem:[%s302 + $0x70] sm:$0xff] %vm1218, %v1212
      %1234 = vst.msk [vmem:[%s302 + $0x78] sm:$0xff] %vm1218, %v1215
      %s1235 = smul.u32 16, %s18
      %p1236 = scmp.lt.s32.totalorder %s1235, 63
      %s1237 = scalar_select %p1236, %s1235, 63
      %s1238 = smul.addr %s1237, 8
      %s1239 = scalar_lea.vmem %s7, %s1238
      // Predicated region
      $region49: #{tpu_custom_call.1} parent=47 // pred_check
        %p1240 = pneg %p193
      $region50: #{tpu_custom_call.1} parent=47 // pred_check_branch
        %1242 = sbr.rel (%p1240) target = $region52
      $region51: #{tpu_custom_call.1} parent=47 // pred_region
        %s1243 = smul.u32 16, %s18
      $region52: #{tpu_custom_call.1} parent=47 // pred_fallthru
        _
    $region48: #{tpu_custom_call.1} parent=5 // pred_fallthru
      _
    %p1244 = scmp.le.s32.totalorder 2, %s13
    // Predicated region
    $region53: #{tpu_custom_call.1} parent=5 // pred_check
      %p1245 = pneg %p1244
    $region54: #{tpu_custom_call.1} parent=5 // pred_check_branch
      %1247 = sbr.rel (%p1245) target = $region56
    $region55: #{tpu_custom_call.1} parent=5 // pred_region
      %s1248 = ssub.s32 %s13, 2
      // Predicated region
      $region57: #{tpu_custom_call.1} parent=55 // pred_check
        %p1249 = pneg %p199
      $region58: #{tpu_custom_call.1} parent=55 // pred_check_branch
        %1251 = sbr.rel (%p1249) target = $region60
      $region59: #{tpu_custom_call.1} parent=55 // pred_region
        %s1252 = smul.u32 16, %s19
        %p1253 = scmp.lt.s32.totalorder %s1252, 63
        %s1254 = scalar_select %p1253, %s1252, 63
        %s1255 = smul.addr %s1254, 8
        %s1256 = scalar_lea.vmem %s7, %s1255
      $region60: #{tpu_custom_call.1} parent=55 // pred_fallthru
        _
    $region56: #{tpu_custom_call.1} parent=5 // pred_fallthru
      _
  $region6: #{tpu_custom_call.1} parent=0 // loop_footer
    %s17 = sadd.s32 1, %s13
  $region7: #{tpu_custom_call.1} parent=0 // loop_footer_branch
    %12 = sbr.rel target = $region3
  $region8: #{tpu_custom_call.1} parent=0 // loop_exit
    _

</llo_original>
